<compile_context>
chip_gen: v5e
topology: v5e:2x2
jax: 0.10.0
libtpu: 0.0.40
codegen_flags: <defaults>
</compile_context>

<pallas_src>
import functools

import jax
import jax.numpy as jnp
from jax.experimental import pallas as pl
from jax.experimental.pallas import tpu as pltpu


def _round_up(x, m):
    return (x + m - 1) // m * m


def _dice_partial_kernel(x_ref, t_ref, o_ref, *, n_classes, softmax, padded):
    """One grid step: (C, TM) score tile + (1, TM) label tile -> per-class partials.

    o_ref is a (C, 3) accumulator [intersect, y_sum, z_sum per class] that stays
    resident in VMEM across the two "arbitrary" grid axes (batch, chunk) and is
    unique per value of the leading "parallel" axis.
    """
    n = pl.program_id(1)
    m = pl.program_id(2)

    @pl.when((n == 0) & (m == 0))
    def _():
        o_ref[...] = jnp.zeros_like(o_ref)

    x = x_ref[...].astype(jnp.float32)              # (C, TM), accumulate in f32
    if softmax:
        mx = jnp.max(x, axis=0, keepdims=True)      # per-pixel softmax over classes
        e = jnp.exp(x - mx)
        denom = jnp.sum(e, axis=0, keepdims=True)
        x = e * pl.reciprocal(denom, approx=True)   # divide on the EUP slot

    t = t_ref[...]                                  # (1, TM) int32 labels (-1 = pad)
    classes = jax.lax.broadcasted_iota(jnp.int32, x.shape, 0)
    onehot = (t == classes).astype(jnp.float32)     # (C, TM); zero where t == -1

    if padded:
        # Padded pixels carry zero label mass already (t == -1); zero their
        # scores too so they do not contribute to z_sum after softmax.
        x = x * (t >= 0).astype(jnp.float32)

    i_p = jnp.sum(x * onehot, axis=-1, keepdims=True)   # (C, 1) intersect partial
    y_p = jnp.sum(onehot, axis=-1, keepdims=True)       # (C, 1) (onehot == onehot^2)
    z_p = jnp.sum(x * x, axis=-1, keepdims=True)        # (C, 1)

    # Single fused accumulator update (one small store instead of three RMWs).
    o_ref[...] += jnp.concatenate([i_p, y_p, z_p], axis=-1)


def dice_loss(inputs, target, n_classes, softmax, weight=None, *,
              tm=4096, num_parallel=2, smooth=1e-5):
    """Pallas TPU implementation of DiceLoss.forward.

    inputs: (N, C, H, W) scores/logits in their native dtype (f32/bf16/...)
    target: (N, H, W) integer class labels
    """
    N, C, H, W = inputs.shape
    assert C == n_classes, "channel dim must equal n_classes"
    HW = H * W

    # Lane-axis tile width: multiple of 128, clamped to the (rounded) pixel count.
    tm = max(128, min(int(tm), _round_up(HW, 128)))
    tm = _round_up(tm, 128)

    chunks = pl.cdiv(HW, tm)                       # pixel chunks per image
    par = max(1, min(int(num_parallel), chunks))   # TC split (v7x); harmless elsewhere
    cpi = _round_up(chunks, par)                   # chunks per image (padded)
    cpc = cpi // par                               # chunks per core
    HW_pad = cpi * tm
    padded = HW_pad != HW

    # Free reshapes of the NCHW layout -- no transpose, no dtype change in HBM.
    x3 = inputs.reshape(N, C, HW)
    t3 = target.reshape(N, 1, HW).astype(jnp.int32)
    if padded:
        x3 = jnp.pad(x3, ((0, 0), (0, 0), (0, HW_pad - HW)))
        t3 = jnp.pad(t3, ((0, 0), (0, 0), (0, HW_pad - HW)), constant_values=-1)

    kernel = functools.partial(_dice_partial_kernel, n_classes=n_classes,
                               softmax=bool(softmax), padded=padded)

    partials = pl.pallas_call(
        kernel,
        out_shape=jax.ShapeDtypeStruct((par, C, 3), jnp.float32),
        grid_spec=pltpu.PrefetchScalarGridSpec(
            num_scalar_prefetch=0,
            grid=(par, N, cpc),
            in_specs=[
                pl.BlockSpec((pl.Squeezed(), C, tm),
                             lambda p, n, m: (n, 0, p * cpc + m)),
                pl.BlockSpec((pl.Squeezed(), 1, tm),
                             lambda p, n, m: (n, 0, p * cpc + m)),
            ],
            out_specs=pl.BlockSpec((pl.Squeezed(), C, 3),
                                   lambda p, n, m: (p, 0, 0)),
        ),
        compiler_params=pltpu.CompilerParams(
            dimension_semantics=("parallel", "arbitrary", "arbitrary")),
    )(x3, t3)

    # Epilogue (tiny) in plain JAX: combine per-core partials into the scalar loss.
    sums = jnp.sum(partials, axis=0)                      # (C, 3)
    intersect, y_sum, z_sum = sums[:, 0], sums[:, 1], sums[:, 2]
    dice = 1.0 - (2.0 * intersect + smooth) / (z_sum + y_sum + smooth)
    w = jnp.asarray([1.0] * n_classes if weight is None else weight, jnp.float32)
    return jnp.sum(dice * w) / n_classes


def _ref_dice_loss(inputs, target, n_classes, softmax, weight=None, smooth=1e-5):
    """Pure-JAX reference mirroring the PyTorch module exactly."""
    x = jax.nn.softmax(inputs, axis=1) if softmax else inputs
    x = x.astype(jnp.float32)
    onehot = (target[:, None, :, :] ==
              jnp.arange(n_classes)[None, :, None, None]).astype(jnp.float32)
    if weight is None:
        weight = [1.0] * n_classes
    loss = 0.0
    for i in range(n_classes):
        s = x[:, i]
        tg = onehot[:, i]
        intersect = jnp.sum(s * tg)
        y_sum = jnp.sum(tg * tg)
        z_sum = jnp.sum(s * s)
        loss += (1.0 - (2.0 * intersect + smooth) / (z_sum + y_sum + smooth)) * weight[i]
    return loss / n_classes


if __name__ == "__main__":
    key = jax.random.PRNGKey(0)
    n_classes = 4
    N = 2

    # Case 1: softmax path, default tile size, small NCHW input.
    H = W = 16
    k1, k2, k3, k4 = jax.random.split(key, 4)
    x = jax.random.normal(k1, (N, n_classes, H, W), dtype=jnp.float32)
    t = jax.random.randint(k2, (N, H, W), 0, n_classes, dtype=jnp.int32)
    out = jax.block_until_ready(dice_loss(x, t, n_classes, softmax=True))
    ref = _ref_dice_loss(x, t, n_classes, softmax=True)
    assert jnp.allclose(out, ref, rtol=2e-3, atol=1e-5), (out, ref)

    # Case 2: no softmax, non-divisible spatial size (pad+mask path), explicit
    # weights, small tile + 2-way parallel split (exercises the megacore path).
    H2 = W2 = 15
    x2 = jax.random.normal(k3, (N, n_classes, H2, W2), dtype=jnp.float32)
    t2 = jax.random.randint(k4, (N, H2, W2), 0, n_classes, dtype=jnp.int32)
    wts = [0.5, 1.0, 1.5, 2.0]
    out2 = jax.block_until_ready(
        dice_loss(x2, t2, n_classes, softmax=False, weight=wts,
                  tm=128, num_parallel=2))
    ref2 = _ref_dice_loss(x2, t2, n_classes, softmax=False, weight=wts)
    assert jnp.allclose(out2, ref2, rtol=1e-4, atol=1e-6), (out2, ref2)

    print("KERNEL_OK")
</pallas_src>

<mosaic_0001>
module attributes {stable_mosaic.version = 11 : i64} {
  func.func @_dice_partial_kernel(%arg0: i32, %arg1: i32, %arg2: i32, %arg3: memref<1x4x256xf32, #tpu.memory_space<vmem>>, %arg4: memref<1x1x256xi32, #tpu.memory_space<vmem>>, %arg5: memref<1x4x3xf32, #tpu.memory_space<vmem>>) attributes {dimension_semantics = [#tpu.dimension_semantics<parallel>, #tpu.dimension_semantics<arbitrary>, #tpu.dimension_semantics<arbitrary>], iteration_bounds = array<i64: 1, 2, 1>, scalar_prefetch = 0 : i64, scratch_operands = 0 : i64, tpu.core_type = #tpu.core_type<tc>, window_params = [{transform_indices = @transform_0, window_bounds = array<i64: 1, 4, 256>}, {transform_indices = @transform_1, window_bounds = array<i64: 1, 1, 256>}, {transform_indices = @transform_2, window_bounds = array<i64: 1, 4, 3>}]} {
    %c0_i32 = arith.constant 0 : i32
    %0 = arith.cmpi eq, %arg1, %c0_i32 : i32
    %c0_i32_0 = arith.constant 0 : i32
    %1 = arith.cmpi eq, %arg2, %c0_i32_0 : i32
    %2 = arith.andi %0, %1 : i1
    %3 = arith.extui %2 : i1 to i32
    %c0_i32_1 = arith.constant 0 : i32
    %4 = arith.cmpi ne, %3, %c0_i32_1 : i32
    scf.if %4 {
      %cst_17 = arith.constant 0.000000e+00 : f32
      %39 = vector.broadcast %cst_17 : f32 to vector<4x3xf32>
      %c0_18 = arith.constant 0 : index
      %c0_19 = arith.constant 0 : index
      %c0_20 = arith.constant 0 : index
      %40 = vector.load %arg5[%c0_18, %c0_19, %c0_20] : memref<1x4x3xf32, #tpu.memory_space<vmem>>, vector<1x4x3xf32>
      %41 = vector.shape_cast %40 : vector<1x4x3xf32> to vector<4x3xf32>
      %42 = vector.shape_cast %39 : vector<4x3xf32> to vector<1x4x3xf32>
      tpu.vector_store %arg5[%c0_18, %c0_19, %c0_20], %42 {strides = array<i32>} : memref<1x4x3xf32, #tpu.memory_space<vmem>>, vector<1x4x3xf32>,
    } else {
    }
    %c0 = arith.constant 0 : index
    %c0_2 = arith.constant 0 : index
    %c0_3 = arith.constant 0 : index
    %5 = vector.load %arg3[%c0, %c0_2, %c0_3] : memref<1x4x256xf32, #tpu.memory_space<vmem>>, vector<1x4x256xf32>
    %6 = vector.shape_cast %5 : vector<1x4x256xf32> to vector<4x256xf32>
    %cst = arith.constant dense<0xFF800000> : vector<256xf32>
    %7 = vector.multi_reduction <maximumf>, %6, %cst [0] : vector<4x256xf32> to vector<256xf32>
    %8 = vector.shape_cast %7 : vector<256xf32> to vector<1x256xf32>
    %9 = vector.broadcast %8 : vector<1x256xf32> to vector<4x256xf32>
    %10 = arith.subf %6, %9 : vector<4x256xf32>
    %11 = math.exp %10 : vector<4x256xf32>
    %cst_4 = arith.constant dense<0.000000e+00> : vector<256xf32>
    %12 = vector.multi_reduction <add>, %11, %cst_4 [0] : vector<4x256xf32> to vector<256xf32>
    %13 = vector.shape_cast %12 : vector<256xf32> to vector<1x256xf32>
    %14 = tpu.reciprocal %13 {approx = true} : vector<1x256xf32> -> vector<1x256xf32>
    %15 = vector.broadcast %14 : vector<1x256xf32> to vector<4x256xf32>
    %16 = arith.mulf %11, %15 : vector<4x256xf32>
    %c0_5 = arith.constant 0 : index
    %c0_6 = arith.constant 0 : index
    %c0_7 = arith.constant 0 : index
    %17 = vector.load %arg4[%c0_5, %c0_6, %c0_7] : memref<1x1x256xi32, #tpu.memory_space<vmem>>, vector<1x1x256xi32>
    %18 = vector.shape_cast %17 : vector<1x1x256xi32> to vector<1x256xi32>
    %19 = tpu.iota {dimensions = array<i32: 0>} : vector<4x256xi32>
    %20 = vector.broadcast %18 : vector<1x256xi32> to vector<4x256xi32>
    %21 = arith.cmpi eq, %20, %19 : vector<4x256xi32>
    %22 = arith.extui %21 : vector<4x256xi1> to vector<4x256xi32>
    %23 = arith.sitofp %22 : vector<4x256xi32> to vector<4x256xf32>
    %24 = arith.mulf %16, %23 : vector<4x256xf32>
    %cst_8 = arith.constant dense<0.000000e+00> : vector<4xf32>
    %25 = vector.multi_reduction <add>, %24, %cst_8 [1] : vector<4x256xf32> to vector<4xf32>
    %26 = vector.shape_cast %25 : vector<4xf32> to vector<4x1xf32>
    %cst_9 = arith.constant dense<0.000000e+00> : vector<4xf32>
    %27 = vector.multi_reduction <add>, %23, %cst_9 [1] : vector<4x256xf32> to vector<4xf32>
    %28 = vector.shape_cast %27 : vector<4xf32> to vector<4x1xf32>
    %29 = arith.mulf %16, %16 : vector<4x256xf32>
    %cst_10 = arith.constant dense<0.000000e+00> : vector<4xf32>
    %30 = vector.multi_reduction <add>, %29, %cst_10 [1] : vector<4x256xf32> to vector<4xf32>
    %31 = vector.shape_cast %30 : vector<4xf32> to vector<4x1xf32>
    %c0_11 = arith.constant 0 : index
    %c0_12 = arith.constant 0 : index
    %c0_13 = arith.constant 0 : index
    %32 = vector.load %arg5[%c0_11, %c0_12, %c0_13] : memref<1x4x3xf32, #tpu.memory_space<vmem>>, vector<1x4x3xf32>
    %33 = vector.shape_cast %32 : vector<1x4x3xf32> to vector<4x3xf32>
    %34 = tpu.concatenate %26, %28, %31 in 1 : vector<4x1xf32>, vector<4x1xf32>, vector<4x1xf32> -> vector<4x3xf32>
    %35 = arith.addf %33, %34 : vector<4x3xf32>
    %c0_14 = arith.constant 0 : index
    %c0_15 = arith.constant 0 : index
    %c0_16 = arith.constant 0 : index
    %36 = vector.load %arg5[%c0_14, %c0_15, %c0_16] : memref<1x4x3xf32, #tpu.memory_space<vmem>>, vector<1x4x3xf32>
    %37 = vector.shape_cast %36 : vector<1x4x3xf32> to vector<4x3xf32>
    %38 = vector.shape_cast %35 : vector<4x3xf32> to vector<1x4x3xf32>
    tpu.vector_store %arg5[%c0_14, %c0_15, %c0_16], %38 {strides = array<i32>} : memref<1x4x3xf32, #tpu.memory_space<vmem>>, vector<1x4x3xf32>,
    return
  }
  func.func @transform_0(%arg0: i32, %arg1: i32, %arg2: i32) -> (i32, i32, i32) {
    %c1_i32 = arith.constant 1 : i32
    %0 = arith.muli %arg0, %c1_i32 : i32
    %1 = arith.addi %0, %arg2 : i32
    %c0_i32 = arith.constant 0 : i32
    %c0_i32_0 = arith.constant 0 : i32
    return %arg1, %c0_i32, %1 : i32, i32, i32
  }
  func.func @transform_1(%arg0: i32, %arg1: i32, %arg2: i32) -> (i32, i32, i32) {
    %c1_i32 = arith.constant 1 : i32
    %0 = arith.muli %arg0, %c1_i32 : i32
    %1 = arith.addi %0, %arg2 : i32
    %c0_i32 = arith.constant 0 : i32
    %c0_i32_0 = arith.constant 0 : i32
    return %arg1, %c0_i32, %1 : i32, i32, i32
  }
  func.func @transform_2(%arg0: i32, %arg1: i32, %arg2: i32) -> (i32, i32, i32) {
    %c0_i32 = arith.constant 0 : i32
    %c0_i32_0 = arith.constant 0 : i32
    %c0_i32_1 = arith.constant 0 : i32
    return %arg0, %c0_i32, %c0_i32_0 : i32, i32, i32
  }
}

</mosaic_0001>

<llo_original>
// kernel: tpu_custom_call.1
$region0: #{tpu_custom_call.1}
  #allocation0 [shape = 'u32[]', space=smem, size = 0x4, offset = 0x4, fixed_abs, tag = 'smem constant byte address 0x4 - core index']
  #allocation1 [shape = 'u32[72,128]{1,0:T(1,128)}', space=vmem, size = 0x9000, scoped, tag = 'internal scratch']
  %s0 = inlined_call_operand.hbm [shape: f32[2,4,256], index: 0, kind: input, shape index: {}]
  %s1 = inlined_call_operand.hbm [shape: s32[2,1,256], index: 1, kind: input, shape index: {}]
  %s2 = inlined_call_operand.vmem [shape: f32[1,4,3], index: 2, kind: output, shape index: {}]
  %s3 = sld [smem:[#allocation0]]
  $region53: #{tpu_custom_call.1} parent=0
    _
  %s5 = ssub.s32 1, %s3
  %s6 = scalar_select 0, %s5, %s3
  $region1: #{tpu_custom_call.1} parent=0
    #allocation2 [shape = 'u8[8192]{0}', space=vmem, size = 0x2000, scoped, tag = 'input window, operand 0']
    #allocation3 [shape = 's32[2]{0}', space=sflag, size = 0x8, scoped, tag = 'scoped memory for tpu_custom_call.1']
    #allocation4 [shape = 'u8[2048]{0}', space=vmem, size = 0x800, scoped, tag = 'input window, operand 1']
    #allocation5 [shape = 's32[2]{0}', space=sflag, size = 0x8, scoped, tag = 'scoped memory for tpu_custom_call.1']
    %7 = vsyncpa [#allocation3], 0
    %s8 = scalar_lea.sflag [#allocation3], 1
    %9 = vsyncpa %s8, 0
    %10 = vsyncpa [#allocation5], 0
    %s11 = scalar_lea.sflag [#allocation5], 1
    %12 = vsyncpa %s11, 0
    loop: start=0, step=1, limit=4
    $region2: #{tpu_custom_call.1} parent=1 // loop_pre_header
      _
    $region3: #{tpu_custom_call.1} parent=1 // loop_header
      %s14 = sphi 0, %s18
      %p15 = scmp.ge.s32.totalorder %s14, 4
      %s21 = sphi 0, %s40
      %s22 = sphi 0, %s36
      %s23 = sphi 0, %s32
      %s24 = sphi 0, %s21
      %s25 = sphi 0, %s22
      %s26 = sphi 0, %s23
      %s27 = sphi 0, %s24
      %s28 = sphi 0, %s25
      %s29 = sphi 0, %s26
      %s47 = sphi 0, %s49
      %s50 = sphi 0, %s47
      %s51 = sphi 0, %s50
      %s67 = sphi 0, %s51
      %s77 = sphi 0, %s79
      %s80 = sphi 0, %s77
      %s81 = sphi 0, %s80
      %s97 = sphi 0, %s81
      %s103 = sphi 0, %s105
      %s106 = sphi 0, %s103
      %s107 = sphi 0, %s106
      %s123 = sphi 0, %s107
    $region4: #{tpu_custom_call.1} parent=1 // loop_header_branch
      %17 = sbr.rel (%p15) target = $region8
    $region5: #{tpu_custom_call.1} parent=1 // loop_body
      %s19 = ssub.s32 %s14, 1
      %s20 = ssub.s32 %s14, 2
      %s30 = sadd.s32 1, %s23
      %p31 = scmp.ge.s32.totalorder %s30, 1
      %s32 = scalar_select %p31, 0, %s30
      %s33 = sadd.s32 1, %s22
      %s34 = scalar_select %p31, %s33, %s22
      %p35 = scmp.ge.s32.totalorder %s34, 2
      %s36 = scalar_select %p35, 0, %s34
      %s37 = sadd.s32 1, %s21
      %s38 = scalar_select %p35, %s37, %s21
      %p39 = scmp.ge.s32.totalorder %s38, 1
      %s40 = scalar_select %p39, 0, %s38
      %s41 = sadd.s32 %s21, %s23
      %s42 = sadd.s32 %s40, %s32
      %s43 = ssub.s32 %s22, %s36
      %s44 = ssub.s32 %s41, %s42
      %s45 = sor.u32 %s43, %s44
      %p46 = scmp.eq.s32.totalorder %s45, 0
      %s48 = sadd.s32 %s47, 1
      %s49 = scalar_select %p46, %s47, %s48
      %p52 = pneg %p46
      %p53 = scmp.eq.s32.totalorder %s14, 1
      %p54 = por %p52, %p53
      %p55 = scmp.ne.s32.totalorder %s47, %s50
      %p56 = scmp.eq.s32.totalorder %s14, 0
      %p57 = por %p55, %p56
      %p58 = scmp.ne.s32.totalorder %s47, %s50
      %p59 = scmp.eq.s32.totalorder %s19, 1
      %p60 = por %p58, %p59
      %p61 = scmp.ne.s32.totalorder %s50, %s51
      %p62 = scmp.eq.s32.totalorder %s19, 0
      %p63 = por %p61, %p62
      %p64 = scmp.ne.s32.totalorder %s50, %s51
      %p65 = scmp.eq.s32.totalorder %s20, 1
      %p66 = por %p64, %p65
      %p68 = scmp.ne.s32.totalorder %s51, %s67
      %p69 = scmp.eq.s32.totalorder %s20, 0
      %p70 = por %p68, %p69
      %s71 = sadd.s32 %s21, %s23
      %s72 = sadd.s32 %s40, %s32
      %s73 = ssub.s32 %s22, %s36
      %s74 = ssub.s32 %s71, %s72
      %s75 = sor.u32 %s73, %s74
      %p76 = scmp.eq.s32.totalorder %s75, 0
      %s78 = sadd.s32 %s77, 1
      %s79 = scalar_select %p76, %s77, %s78
      %p82 = pneg %p76
      %p83 = scmp.eq.s32.totalorder %s14, 1
      %p84 = por %p82, %p83
      %p85 = scmp.ne.s32.totalorder %s77, %s80
      %p86 = scmp.eq.s32.totalorder %s14, 0
      %p87 = por %p85, %p86
      %p88 = scmp.ne.s32.totalorder %s77, %s80
      %p89 = scmp.eq.s32.totalorder %s19, 1
      %p90 = por %p88, %p89
      %p91 = scmp.ne.s32.totalorder %s80, %s81
      %p92 = scmp.eq.s32.totalorder %s19, 0
      %p93 = por %p91, %p92
      %p94 = scmp.ne.s32.totalorder %s80, %s81
      %p95 = scmp.eq.s32.totalorder %s20, 1
      %p96 = por %p94, %p95
      %p98 = scmp.ne.s32.totalorder %s81, %s97
      %p99 = scmp.eq.s32.totalorder %s20, 0
      %p100 = por %p98, %p99
      %s101 = ssub.s32 %s21, %s40
      %p102 = scmp.eq.s32.totalorder %s101, 0
      %s104 = sadd.s32 %s103, 1
      %s105 = scalar_select %p102, %s103, %s104
      %p108 = pneg %p102
      %p109 = scmp.eq.s32.totalorder %s14, 1
      %p110 = por %p108, %p109
      %p111 = scmp.ne.s32.totalorder %s103, %s106
      %p112 = scmp.eq.s32.totalorder %s14, 0
      %p113 = por %p111, %p112
      %p114 = scmp.ne.s32.totalorder %s103, %s106
      %p115 = scmp.eq.s32.totalorder %s19, 1
      %p116 = por %p114, %p115
      %p117 = scmp.ne.s32.totalorder %s106, %s107
      %p118 = scmp.eq.s32.totalorder %s19, 0
      %p119 = por %p117, %p118
      %p120 = scmp.ne.s32.totalorder %s106, %s107
      %p121 = scmp.eq.s32.totalorder %s20, 1
      %p122 = por %p120, %p121
      %p124 = scmp.ne.s32.totalorder %s107, %s123
      %p125 = scmp.eq.s32.totalorder %s20, 0
      %p126 = por %p124, %p125
      %p127 = scmp.le.s32.totalorder 1, %s14
      %p128 = scmp.lt.s32.totalorder %s14, 3
      %p129 = pnand %p127, %p128
      %p130 = pneg %p129
      // Predicated region
      $region9: #{tpu_custom_call.1} parent=5 // pred_check
        _
      $region10: #{tpu_custom_call.1} parent=5 // pred_check_branch
        %132 = sbr.rel (%p129) target = $region12
      $region11: #{tpu_custom_call.1} parent=5 // pred_region
        %s133 = ssub.s32 %s14, 1
      $region12: #{tpu_custom_call.1} parent=5 // pred_fallthru
        _
      %p134 = scmp.lt.s32.totalorder %s14, 2
      // Predicated region
      $region13: #{tpu_custom_call.1} parent=5 // pred_check
        %p135 = pneg %p134
      $region14: #{tpu_custom_call.1} parent=5 // pred_check_branch
        %137 = sbr.rel (%p135) target = $region16
      $region15: #{tpu_custom_call.1} parent=5 // pred_region
        // Predicated region
        $region17: #{tpu_custom_call.1} parent=15 // pred_check
          %p138 = pneg %p57
        $region18: #{tpu_custom_call.1} parent=15 // pred_check_branch
          %140 = sbr.rel (%p138) target = $region20
        $region19: #{tpu_custom_call.1} parent=15 // pred_region
          %s141 = sand.u32 %s47, 1
          %s142 = scalar_lea.sflag [#allocation3], %s141
          %s143 = sand.u32 %s47, 1
          %s144 = smul.addr %s143, 8
          %s145 = scalar_lea.vmem [#allocation2], %s144
          %s146 = sadd.s32 %s21, %s23
          %s147 = smul.u32 2, %s146
          %149 = vsyncadd %s142, 0
          %s150 = smul.addr %s22, 2
          %s151 = sadd.s32 %s147, %s150
          %s152 = smul.addr %s151, 4
          %s153 = scalar_lea.hbm %s0, %s152
          %s155 = sshll.u32 %s153, 4
          %s156 = int_to_ptr.hbm [resolvable:$true] %s155
          %s157 = sshll.u32 %s145, 4
          %s158 = int_to_ptr.vmem [resolvable:$true] %s157
          %160 = dma.hbm_to_vmem [thread:$0]  %s156, 128, %s158, %s142
        $region20: #{tpu_custom_call.1} parent=15 // pred_fallthru
          _
        // Predicated region
        $region21: #{tpu_custom_call.1} parent=15 // pred_check
          %p161 = pneg %p87
        $region22: #{tpu_custom_call.1} parent=15 // pred_check_branch
          %163 = sbr.rel (%p161) target = $region24
        $region23: #{tpu_custom_call.1} parent=15 // pred_region
          %s164 = sand.u32 %s77, 1
          %s165 = scalar_lea.sflag [#allocation5], %s164
          %s166 = sand.u32 %s77, 1
          %s167 = smul.addr %s166, 2
          %s168 = scalar_lea.vmem [#allocation4], %s167
          %s169 = sadd.s32 %s21, %s23
          %s170 = smul.u32 2, %s169
          %172 = vsyncadd %s165, 0
          %s173 = smul.addr %s22, 2
          %s174 = sadd.s32 %s170, %s173
          %s175 = scalar_lea.hbm %s1, %s174
          %s177 = sshll.u32 %s175, 4
          %s178 = int_to_ptr.hbm [resolvable:$true] %s177
          %s179 = sshll.u32 %s168, 4
          %s180 = int_to_ptr.vmem [resolvable:$true] %s179
          %182 = dma.hbm_to_vmem [thread:$0]  %s178, 32, %s180, %s165
        $region24: #{tpu_custom_call.1} parent=15 // pred_fallthru
          _
      $region16: #{tpu_custom_call.1} parent=5 // pred_fallthru
        _
      %p183 = scmp.le.s32.totalorder 1, %s14
      %p184 = scmp.lt.s32.totalorder %s14, 3
      %p185 = pnand %p183, %p184
      %p186 = pneg %p185
      // Predicated region
      $region25: #{tpu_custom_call.1} parent=5 // pred_check
        _
      $region26: #{tpu_custom_call.1} parent=5 // pred_check_branch
        %188 = sbr.rel (%p185) target = $region28
      $region27: #{tpu_custom_call.1} parent=5 // pred_region
        %s189 = ssub.s32 %s14, 1
        %s190 = sand.u32 %s50, 1
        %s191 = scalar_lea.sflag [#allocation3], %s190
        %s192 = sand.u32 %s50, 1
        %s193 = smul.addr %s192, 8
        %s194 = scalar_lea.vmem [#allocation2], %s193
        // Predicated region
        $region29: #{tpu_custom_call.1} parent=27 // pred_check
          %p195 = pneg %p63
        $region30: #{tpu_custom_call.1} parent=27 // pred_check_branch
          %197 = sbr.rel (%p195) target = $region32
        $region31: #{tpu_custom_call.1} parent=27 // pred_region
          %199 = dma.done %s191, 128
        $region32: #{tpu_custom_call.1} parent=27 // pred_fallthru
          _
        %s200 = sand.u32 %s80, 1
        %s201 = scalar_lea.sflag [#allocation5], %s200
        %s202 = sand.u32 %s80, 1
        %s203 = smul.addr %s202, 2
        %s204 = scalar_lea.vmem [#allocation4], %s203
        // Predicated region
        $region33: #{tpu_custom_call.1} parent=27 // pred_check
          %p205 = pneg %p93
        $region34: #{tpu_custom_call.1} parent=27 // pred_check_branch
          %207 = sbr.rel (%p205) target = $region36
        $region35: #{tpu_custom_call.1} parent=27 // pred_region
          %209 = dma.done %s201, 32
        $region36: #{tpu_custom_call.1} parent=27 // pred_fallthru
          _
        %s210 = sand.u32 %s50, 1
        %s211 = scalar_lea.sflag [#allocation3], %s210
        %s212 = sand.u32 %s50, 1
        %s213 = smul.addr %s212, 8
        %s214 = scalar_lea.vmem [#allocation2], %s213
        %p215 = pneg %p63
        %p216 = pneg %p60
        %s217 = sand.u32 %s80, 1
        %s218 = scalar_lea.sflag [#allocation5], %s217
        %s219 = sand.u32 %s80, 1
        %s220 = smul.addr %s219, 2
        %s221 = scalar_lea.vmem [#allocation4], %s220
        %p222 = pneg %p93
        %p223 = pneg %p90
        %p224 = pneg %p119
        %p225 = pneg %p116
        %p226 = scmp.lt.s32.totalorder %s24, 0
        %s227 = scalar_select %p226, %s24, 0
        %s228 = smul.addr %s227, 4
        %s229 = scalar_lea.vmem %s2, %s228
        %s230 = sadd.s32 %s24, %s26
        %s231 = smul.u32 2, %s230
        %s232 = sadd.s32 %s24, %s26
        %s233 = smul.u32 2, %s232
        %p234 = scmp.lt.s32.totalorder %s24, 0
        %s235 = scalar_select %p234, %s24, 0
        %s236 = smul.addr %s235, 4
        %s237 = scalar_lea.vmem %s2, %s236
        %p238 = scmp.eq.s32.totalorder %s25, 0
        %p239 = scmp.eq.s32.totalorder %s26, 0
        %p240 = pnand %p238, %p239
        %p241 = pneg %p240
        // Predicated region
        $region37: #{tpu_custom_call.1} parent=27 // pred_check
          _
        $region38: #{tpu_custom_call.1} parent=27 // pred_check_branch
          %243 = sbr.rel (%p240) target = $region40
        $region39: #{tpu_custom_call.1} parent=27 // pred_region
          %vm244 = vcmask 19456
          %245 = vst.msk [vmem:[%s237] sm:$0xf] %vm244, 0.0
        $region40: #{tpu_custom_call.1} parent=27 // pred_fallthru
          _
        %v246 = vld [vmem:[%s194] sm:$0xff]
        %248 = vst [vmem:[#allocation1] ss:$2 sm:$0xff] %v246
        %v249 = vld.sshfl [vmem:[#allocation1] sm:$0xff pattern:$0x75316420]
        %v250 = vld.sshfl [vmem:[#allocation1 + $0x8] sm:$0xff pattern:$0x75316420]
        %vm253 = vcmask 1043456
        %v254 = vsel %vm253, %v249, -inf
        %v255 = vrot.slane %v254, 4
        %v256 = vmax.f32 %v254, %v255
        %v257 = vrot.slane %v256, 2
        %v258 = vmax.f32 %v256, %v257
        %v259 = vrot.slane %v258, 1
        %v260 = vmax.f32 %v258, %v259
        %v261 = vsel %vm253, %v250, -inf
        %v262 = vrot.slane %v261, 4
        %v263 = vmax.f32 %v261, %v262
        %v264 = vrot.slane %v263, 2
        %v265 = vmax.f32 %v263, %v264
        %v266 = vrot.slane %v265, 1
        %v267 = vmax.f32 %v265, %v266
        %v270 = vrot.slane %v267, 4
        %v271 = vsel %vm253, %v260, %v270
        %v273 = vsub.f32 %v246, %v271
        %v274 = vmul.f32 %v273, 1.442695
        %v275 = vpow.pop %v274
        %277 = vst [vmem:[#allocation1] ss:$2 sm:$0xff] %v275
        %v278 = vld.sshfl [vmem:[#allocation1] sm:$0xff pattern:$0x75316420]
        %v279 = vld.sshfl [vmem:[#allocation1 + $0x8] sm:$0xff pattern:$0x75316420]
        %v282 = vsel %vm253, %v278, 0.0
        %v283 = vrot.slane %v282, 4
        %v284 = vadd.f32 %v282, %v283
        %v285 = vrot.slane %v284, 2
        %v286 = vadd.f32 %v284, %v285
        %v287 = vrot.slane %v286, 1
        %v288 = vadd.f32 %v286, %v287
        %v289 = vsel %vm253, %v279, 0.0
        %v290 = vrot.slane %v289, 4
        %v291 = vadd.f32 %v289, %v290
        %v292 = vrot.slane %v291, 2
        %v293 = vadd.f32 %v291, %v292
        %v294 = vrot.slane %v293, 1
        %v295 = vadd.f32 %v293, %v294
        %v296 = vrcp.pop %v288
        %v297 = vrcp.pop %v295
        %v300 = vrot.slane %v297, 4
        %v301 = vsel %vm253, %v296, %v300
        %v303 = vmul.f32 %v275, %v301
        %v304 = vld [vmem:[%s204] sm:$0x3]
        %v305 = vlaneseq
        %v306 = vshrl.u32 %v305, 7
        %v307 = vperm.slane %v304, 0
        %v308 = vperm.slane %v304, 1
        %vm309 = vcmp.eq.s32.totalorder %v307, %v306
        %vm310 = vcmp.eq.s32.totalorder %v308, %v306
        %v311 = vsel %vm309, 1, 0
        %v312 = vsel %vm310, 1, 0
        %v313 = vcvt.s32.f32 %v311
        %v314 = vcvt.s32.f32 %v312
        %v317 = vrot.slane %v314, 4
        %v318 = vsel %vm253, %v313, %v317
        %v320 = vmul.f32 %v303, %v318
        %322 = vst [vmem:[#allocation1] ss:$2 sm:$0xff] %v320
        %v323 = vld.sshfl [vmem:[#allocation1] sm:$0xff pattern:$0x75316420]
        %v324 = vld.sshfl [vmem:[#allocation1 + $0x8] sm:$0xff pattern:$0x75316420]
        %v327 = vsel %vm253, %v323, 0.0
        %v328 = vsel %vm253, %v324, 0.0
        %v329 = vadd.f32 %v327, %v328
        %330 = vadd.xlane.f32.xlu0 %v329
        %v331 = vpop.xlane.xlu0 %330
        %v332 = vsel %vm253, %v313, 0.0
        %v333 = vsel %vm253, %v314, 0.0
        %v334 = vadd.f32 %v332, %v333
        %335 = vadd.xlane.f32.xlu0 %v334
        %v336 = vpop.xlane.xlu0 %335
        %v337 = vmul.f32 %v303, %v303
        %339 = vst [vmem:[#allocation1] ss:$2 sm:$0xff] %v337
        %v340 = vld.sshfl [vmem:[#allocation1] sm:$0xff pattern:$0x75316420]
        %v341 = vld.sshfl [vmem:[#allocation1 + $0x8] sm:$0xff pattern:$0x75316420]
        %v344 = vsel %vm253, %v340, 0.0
        %v345 = vsel %vm253, %v341, 0.0
        %v346 = vadd.f32 %v344, %v345
        %347 = vadd.xlane.f32.xlu0 %v346
        %v348 = vpop.xlane.xlu0 %347
        %v349 = vld [vmem:[%s237] sm:$0xf]
        %vm350 = vcmask 7168
        %v351 = vsel %vm350, %v331, %v336
        %vm352 = vcmask 15360
        %v353 = vsel %vm352, %v351, %v348
        %v354 = vadd.f32 %v349, %v353
        %vm355 = vcmask 19456
        %356 = vst.msk [vmem:[%s237] sm:$0xf] %vm355, %v354
        %p357 = scmp.lt.s32.totalorder %s24, 0
        %s358 = scalar_select %p357, %s24, 0
        %s359 = smul.addr %s358, 4
        %s360 = scalar_lea.vmem %s2, %s359
        // Predicated region
        $region41: #{tpu_custom_call.1} parent=27 // pred_check
          %p361 = pneg %p116
        $region42: #{tpu_custom_call.1} parent=27 // pred_check_branch
          %363 = sbr.rel (%p361) target = $region44
        $region43: #{tpu_custom_call.1} parent=27 // pred_region
          _
        $region44: #{tpu_custom_call.1} parent=27 // pred_fallthru
          _
        // Predicated region
        $region45: #{tpu_custom_call.1} parent=27 // pred_check
          %p364 = pneg %p116
        $region46: #{tpu_custom_call.1} parent=27 // pred_check_branch
          %366 = sbr.rel (%p364) target = $region48
        $region47: #{tpu_custom_call.1} parent=27 // pred_region
          %p367 = scmp.lt.s32.totalorder %s24, 0
          %s368 = scalar_select %p367, %s24, 0
          %s369 = smul.addr %s368, 4
          %s370 = scalar_lea.vmem %s2, %s369
        $region48: #{tpu_custom_call.1} parent=27 // pred_fallthru
          _
      $region28: #{tpu_custom_call.1} parent=5 // pred_fallthru
        _
      %p371 = scmp.le.s32.totalorder 2, %s14
      // Predicated region
      $region49: #{tpu_custom_call.1} parent=5 // pred_check
        %p372 = pneg %p371
      $region50: #{tpu_custom_call.1} parent=5 // pred_check_branch
        %374 = sbr.rel (%p372) target = $region52
      $region51: #{tpu_custom_call.1} parent=5 // pred_region
        %s375 = ssub.s32 %s14, 2
      $region52: #{tpu_custom_call.1} parent=5 // pred_fallthru
        _
    $region6: #{tpu_custom_call.1} parent=1 // loop_footer
      %s18 = sadd.s32 1, %s14
    $region7: #{tpu_custom_call.1} parent=1 // loop_footer_branch
      %13 = sbr.rel target = $region3
    $region8: #{tpu_custom_call.1} parent=1 // loop_exit
      _
    %376 = vsyncpa [#allocation3], 1
    %s377 = scalar_lea.sflag [#allocation3], 1
    %378 = vsyncpa %s377, 1
    %379 = vsyncpa [#allocation5], 1
    %s380 = scalar_lea.sflag [#allocation5], 1
    %381 = vsyncpa %s380, 1

</llo_original>
